<compile_context>
chip_gen: v7x
topology: tpu7x:2x2x1
jax: 0.10.0
libtpu: 0.0.40
codegen_flags: <defaults>
</compile_context>

<pallas_src>
import numpy as np
import jax
import jax.numpy as jnp
from jax import lax
from jax.experimental import pallas as pl
from jax.experimental.pallas import tpu as pltpu


def _round_up(v, m):
    return (v + m - 1) // m * m


def _choose_tile_b(batch, num_classes, itemsize):
    """Batch tile: big enough to amortize per-step overhead, small enough
    that the double-buffered x stream stays ~<= 16 MiB (fits all of
    v5e/v6e/v7x VMEM with headroom)."""
    c_pad = _round_up(max(num_classes, 128), 128)   # VMEM tiles are lane-padded
    budget = 16 * 1024 * 1024
    tb = budget // (2 * c_pad * itemsize)
    tb = max(8, (tb // 8) * 8)
    tb = min(tb, 2048)
    tb = min(tb, _round_up(batch, 8))
    return int(tb)


def _make_ldam_kernel(s, batch, tile_b):
    # Plain Python floats -> folded into the jaxpr as constants (no capture).
    s_f = float(s)
    inv_b = float(1.0 / batch)

    def kernel(x_ref, tgt_ref, mb_ref, out_ref, acc_ref):
        i = pl.program_id(0)

        @pl.when(i == 0)
        def _():
            acc_ref[...] = jnp.zeros_like(acc_ref)

        x = x_ref[...].astype(jnp.float32)      # [TB, C]  (bf16 -> f32)
        tgt = tgt_ref[...]                      # [TB, 1] int32
        m_b = mb_ref[...]                       # [TB, 1] f32 == m_list[target]

        tb, c = x.shape
        col_ids = lax.broadcasted_iota(jnp.int32, (tb, c), 1)
        mask = col_ids == tgt                   # [TB, C] boolean one-hot

        # Margin-adjusted, scaled logits: s * where(onehot, x - m[target], x).
        logits = s_f * jnp.where(mask, x - m_b, x)

        # Row logsumexp (max-shifted): 2 lane reductions.
        row_max = jnp.max(logits, axis=-1, keepdims=True)
        lse = jnp.log(jnp.sum(jnp.exp(logits - row_max),
                              axis=-1, keepdims=True)) + row_max   # [TB, 1]

        # Target logit: 1 lane reduction (the margin comes in via m_b).
        x_t = jnp.sum(jnp.where(mask, x, 0.0), axis=-1, keepdims=True)
        tgt_logit = s_f * (x_t - m_b)                              # [TB, 1]

        per_sample = lse - tgt_logit                               # [TB, 1]

        # Ragged last tile: select (not multiply) so garbage/OOB rows cannot
        # inject NaN into the accumulator.
        row_ids = i * tile_b + lax.broadcasted_iota(jnp.int32, (tb, 1), 0)
        acc_ref[...] += jnp.where(row_ids < batch, per_sample, 0.0)

        @pl.when(i == pl.num_programs(0) - 1)
        def _():
            out_ref[...] = jnp.sum(acc_ref[...], keepdims=True) * inv_b

    return kernel


def ldam_loss(x, target, m_list, s):
    """x: [B, C] float (bf16 or f32), target: [B] int, m_list: [C] float,
    s: python float > 0. Returns the scalar mean LDAM cross-entropy."""
    B, C = x.shape
    TB = _choose_tile_b(B, C, jnp.dtype(x.dtype).itemsize)
    num_tiles = pl.cdiv(B, TB)

    tgt2d = target.reshape(B, 1).astype(jnp.int32)
    # Gather the per-sample margin once in the wrapper so the kernel avoids a
    # 4th [TB, C] reduction (sum(onehot * m_list)).
    m_b = m_list.astype(jnp.float32)[target].reshape(B, 1)

    kernel = _make_ldam_kernel(s, B, TB)

    out = pl.pallas_call(
        kernel,
        out_shape=jax.ShapeDtypeStruct((1, 1), jnp.float32),
        grid_spec=pltpu.PrefetchScalarGridSpec(
            num_scalar_prefetch=0,
            grid=(num_tiles,),
            in_specs=[
                # x streamed unpadded: last dim = full C (full-dim exemption).
                # (pipeline_mode=pl.Buffered(3) is an option if xprof shows
                # exposed DMA; default double-buffering kept here.)
                pl.BlockSpec((TB, C), lambda i: (i, 0)),
                pl.BlockSpec((TB, 1), lambda i: (i, 0)),   # target
                pl.BlockSpec((TB, 1), lambda i: (i, 0)),   # m_list[target]
            ],
            out_specs=pl.BlockSpec((1, 1), lambda i: (0, 0)),  # resident scalar
            scratch_shapes=[pltpu.VMEM((TB, 1), jnp.float32)],
        ),
        compiler_params=pltpu.CompilerParams(
            dimension_semantics=("arbitrary",),   # reduction over batch tiles
            vmem_limit_bytes=48 * 1024 * 1024,
        ),
    )(x, tgt2d, m_b)
    return out[0, 0]


def make_m_list(cls_num_list, max_m=0.5):
    m = 1.0 / np.sqrt(np.sqrt(np.asarray(cls_num_list, dtype=np.float64)))
    m = m * (max_m / np.max(m))
    return jnp.asarray(m, dtype=jnp.float32)


if __name__ == "__main__":
    B, C = 8, 16  # batch, num classes (small demo shapes)

    key = jax.random.PRNGKey(0)
    kx, kt = jax.random.split(key)
    # bf16 activations halve the dominant HBM stream; kernel math stays f32.
    x = jax.random.normal(kx, (B, C), dtype=jnp.float32).astype(jnp.bfloat16)
    target = jax.random.randint(kt, (B,), 0, C, dtype=jnp.int32)

    # Deterministic synthetic class-count list (imbalanced, like LDAM usage).
    cls_num_list = [int(1000 / (i + 1)) for i in range(C)]
    m_list = make_m_list(cls_num_list, max_m=0.5)
    s = 30.0

    loss = ldam_loss(x, target, m_list, s)
    jax.block_until_ready(loss)

    # Pure-JAX reference on the same bf16-quantized x (upcast to f32, same as
    # the kernel does internally).
    x32 = x.astype(jnp.float32)
    onehot = jax.nn.one_hot(target, C, dtype=jnp.float32)
    logits = s * (x32 - onehot * m_list[None, :])
    ref = jnp.mean(jax.nn.logsumexp(logits, axis=-1)
                   - jnp.sum(onehot * logits, axis=-1))
    assert jnp.allclose(loss, ref, atol=1e-4, rtol=1e-4), (loss, ref)

    print("KERNEL_OK")
</pallas_src>

<mosaic_0001>
module attributes {stable_mosaic.version = 11 : i64} {
  func.func @kernel(%arg0: i32, %arg1: memref<8x16xbf16, #tpu.memory_space<vmem>>, %arg2: memref<8x1xi32, #tpu.memory_space<vmem>>, %arg3: memref<8x1xf32, #tpu.memory_space<vmem>>, %arg4: memref<1x1xf32, #tpu.memory_space<vmem>>, %arg5: memref<8x1xf32, #tpu.memory_space<vmem>>) attributes {dimension_semantics = [#tpu.dimension_semantics<arbitrary>], iteration_bounds = array<i64: 1>, scalar_prefetch = 0 : i64, scratch_operands = 1 : i64, tpu.core_type = #tpu.core_type<tc>, window_params = [{transform_indices = @transform_0, window_bounds = array<i64: 8, 16>}, {transform_indices = @transform_1, window_bounds = array<i64: 8, 1>}, {transform_indices = @transform_2, window_bounds = array<i64: 8, 1>}, {pipeline_mode = #tpu.pipeline_mode<synchronous>, transform_indices = @transform_3, window_bounds = array<i64: 1, 1>}]} {
    %c0_i32 = arith.constant 0 : i32
    %0 = arith.cmpi eq, %arg0, %c0_i32 : i32
    %1 = arith.extui %0 : i1 to i32
    %c0_i32_0 = arith.constant 0 : i32
    %2 = arith.cmpi ne, %1, %c0_i32_0 : i32
    scf.if %2 {
      %cst_19 = arith.constant 0.000000e+00 : f32
      %46 = vector.broadcast %cst_19 : f32 to vector<8x1xf32>
      %c0_20 = arith.constant 0 : index
      %c0_21 = arith.constant 0 : index
      %47 = vector.load %arg5[%c0_20, %c0_21] : memref<8x1xf32, #tpu.memory_space<vmem>>, vector<8x1xf32>
      tpu.vector_store %arg5[%c0_20, %c0_21], %46 {strides = array<i32>} : memref<8x1xf32, #tpu.memory_space<vmem>>, vector<8x1xf32>,
    } else {
    }
    %c0 = arith.constant 0 : index
    %c0_1 = arith.constant 0 : index
    %3 = vector.load %arg1[%c0, %c0_1] : memref<8x16xbf16, #tpu.memory_space<vmem>>, vector<8x16xbf16>
    %4 = arith.extf %3 : vector<8x16xbf16> to vector<8x16xf32>
    %c0_2 = arith.constant 0 : index
    %c0_3 = arith.constant 0 : index
    %5 = vector.load %arg2[%c0_2, %c0_3] : memref<8x1xi32, #tpu.memory_space<vmem>>, vector<8x1xi32>
    %c0_4 = arith.constant 0 : index
    %c0_5 = arith.constant 0 : index
    %6 = vector.load %arg3[%c0_4, %c0_5] : memref<8x1xf32, #tpu.memory_space<vmem>>, vector<8x1xf32>
    %7 = tpu.iota {dimensions = array<i32: 1>} : vector<8x16xi32>
    %8 = vector.broadcast %5 : vector<8x1xi32> to vector<8x16xi32>
    %9 = arith.cmpi eq, %7, %8 : vector<8x16xi32>
    %10 = vector.broadcast %6 : vector<8x1xf32> to vector<8x16xf32>
    %11 = arith.subf %4, %10 : vector<8x16xf32>
    %12 = arith.select %9, %11, %4 : vector<8x16xi1>, vector<8x16xf32>
    %cst = arith.constant 3.000000e+01 : f32
    %13 = vector.broadcast %cst : f32 to vector<8x16xf32>
    %14 = arith.mulf %13, %12 : vector<8x16xf32>
    %cst_6 = arith.constant dense<0xFF800000> : vector<8xf32>
    %15 = vector.multi_reduction <maximumf>, %14, %cst_6 [1] : vector<8x16xf32> to vector<8xf32>
    %16 = vector.shape_cast %15 : vector<8xf32> to vector<8x1xf32>
    %17 = vector.broadcast %16 : vector<8x1xf32> to vector<8x16xf32>
    %18 = arith.subf %14, %17 : vector<8x16xf32>
    %19 = math.exp %18 : vector<8x16xf32>
    %cst_7 = arith.constant dense<0.000000e+00> : vector<8xf32>
    %20 = vector.multi_reduction <add>, %19, %cst_7 [1] : vector<8x16xf32> to vector<8xf32>
    %21 = vector.shape_cast %20 : vector<8xf32> to vector<8x1xf32>
    %22 = math.log %21 : vector<8x1xf32>
    %23 = arith.addf %22, %16 : vector<8x1xf32>
    %cst_8 = arith.constant 0.000000e+00 : f32
    %24 = vector.broadcast %cst_8 : f32 to vector<8x16xf32>
    %25 = arith.select %9, %4, %24 : vector<8x16xi1>, vector<8x16xf32>
    %cst_9 = arith.constant dense<0.000000e+00> : vector<8xf32>
    %26 = vector.multi_reduction <add>, %25, %cst_9 [1] : vector<8x16xf32> to vector<8xf32>
    %27 = vector.shape_cast %26 : vector<8xf32> to vector<8x1xf32>
    %28 = arith.subf %27, %6 : vector<8x1xf32>
    %cst_10 = arith.constant 3.000000e+01 : f32
    %29 = vector.broadcast %cst_10 : f32 to vector<8x1xf32>
    %30 = arith.mulf %29, %28 : vector<8x1xf32>
    %31 = arith.subf %23, %30 : vector<8x1xf32>
    %c8_i32 = arith.constant 8 : i32
    %32 = arith.muli %arg0, %c8_i32 : i32
    %33 = tpu.iota {dimensions = array<i32: 0>} : vector<8x1xi32>
    %34 = vector.broadcast %32 : i32 to vector<8x1xi32>
    %35 = arith.addi %34, %33 : vector<8x1xi32>
    %c0_11 = arith.constant 0 : index
    %c0_12 = arith.constant 0 : index
    %36 = vector.load %arg5[%c0_11, %c0_12] : memref<8x1xf32, #tpu.memory_space<vmem>>, vector<8x1xf32>
    %c8_i32_13 = arith.constant 8 : i32
    %37 = vector.broadcast %c8_i32_13 : i32 to vector<8x1xi32>
    %38 = arith.cmpi slt, %35, %37 : vector<8x1xi32>
    %cst_14 = arith.constant 0.000000e+00 : f32
    %39 = vector.broadcast %cst_14 : f32 to vector<8x1xf32>
    %40 = arith.select %38, %31, %39 : vector<8x1xi1>, vector<8x1xf32>
    %41 = arith.addf %36, %40 : vector<8x1xf32>
    %c0_15 = arith.constant 0 : index
    %c0_16 = arith.constant 0 : index
    %42 = vector.load %arg5[%c0_15, %c0_16] : memref<8x1xf32, #tpu.memory_space<vmem>>, vector<8x1xf32>
    tpu.vector_store %arg5[%c0_15, %c0_16], %41 {strides = array<i32>} : memref<8x1xf32, #tpu.memory_space<vmem>>, vector<8x1xf32>,
    %c0_i32_17 = arith.constant 0 : i32
    %43 = arith.cmpi eq, %arg0, %c0_i32_17 : i32
    %44 = arith.extui %43 : i1 to i32
    %c0_i32_18 = arith.constant 0 : i32
    %45 = arith.cmpi ne, %44, %c0_i32_18 : i32
    scf.if %45 {
      %c0_19 = arith.constant 0 : index
      %c0_20 = arith.constant 0 : index
      %46 = vector.load %arg5[%c0_19, %c0_20] : memref<8x1xf32, #tpu.memory_space<vmem>>, vector<8x1xf32>
      %47 = vector.shape_cast %46 : vector<8x1xf32> to vector<1x8x1xf32>
      %cst_21 = arith.constant dense<0.000000e+00> : vector<1xf32>
      %48 = vector.multi_reduction <add>, %47, %cst_21 [1, 2] : vector<1x8x1xf32> to vector<1xf32>
      %49 = vector.shape_cast %48 : vector<1xf32> to vector<1x1x1xf32>
      %50 = vector.extract %49[0, 0, 0] : f32 from vector<1x1x1xf32>
      %51 = vector.broadcast %50 : f32 to vector<1x1xf32>
      %cst_22 = arith.constant 1.250000e-01 : f32
      %52 = vector.broadcast %cst_22 : f32 to vector<1x1xf32>
      %53 = arith.mulf %51, %52 : vector<1x1xf32>
      %c0_23 = arith.constant 0 : index
      %c0_24 = arith.constant 0 : index
      %54 = vector.load %arg4[%c0_23, %c0_24] : memref<1x1xf32, #tpu.memory_space<vmem>>, vector<1x1xf32>
      tpu.vector_store %arg4[%c0_23, %c0_24], %53 {strides = array<i32>} : memref<1x1xf32, #tpu.memory_space<vmem>>, vector<1x1xf32>,
    } else {
    }
    return
  }
  func.func @transform_0(%arg0: i32) -> (i32, i32) {
    %c0_i32 = arith.constant 0 : i32
    %c0_i32_0 = arith.constant 0 : i32
    return %arg0, %c0_i32 : i32, i32
  }
  func.func @transform_1(%arg0: i32) -> (i32, i32) {
    %c0_i32 = arith.constant 0 : i32
    %c0_i32_0 = arith.constant 0 : i32
    return %arg0, %c0_i32 : i32, i32
  }
  func.func @transform_2(%arg0: i32) -> (i32, i32) {
    %c0_i32 = arith.constant 0 : i32
    %c0_i32_0 = arith.constant 0 : i32
    return %arg0, %c0_i32 : i32, i32
  }
  func.func @transform_3(%arg0: i32) -> (i32, i32) {
    %c0_i32 = arith.constant 0 : i32
    %c0_i32_0 = arith.constant 0 : i32
    %c0_i32_1 = arith.constant 0 : i32
    return %c0_i32, %c0_i32_0 : i32, i32
  }
}

</mosaic_0001>

<llo_original>
// kernel: tpu_custom_call.1
$region0: #{tpu_custom_call.1}
  #allocation0 [shape = 'u32[]', space=smem, size = 0x4, offset = 0x4, fixed_abs, tag = 'smem constant byte address 0x4 - core index']
  #allocation1 [shape = 'u32[144,128]{1,0:T(1,128)}', space=vmem, size = 0x12000, scoped, tag = 'internal scratch']
  #allocation2 [shape = 'f32[8,1]{1,0:T(8,128)}', space=vmem, size = 0x1000, scoped, tag = 'scratch operand']
  %s0 = inlined_call_operand.vmem [shape: bf16[8,16], index: 0, kind: input, shape index: {}]
  %s1 = inlined_call_operand.vmem [shape: s32[8,1], index: 1, kind: input, shape index: {}]
  %s2 = inlined_call_operand.vmem [shape: f32[8,1], index: 2, kind: input, shape index: {}]
  %s3 = inlined_call_operand.hbm [shape: f32[1,1], index: 3, kind: output, shape index: {}]
  %s4 = sld [smem:[#allocation0]]
  $region30: #{tpu_custom_call.1} parent=0
    _
  %s6 = ssub.s32 1, %s4
  %s7 = scalar_select 0, %s6, %s4
  $region1: #{tpu_custom_call.1} parent=0
    #allocation3 [shape = 'u8[512]{0}', space=vmem, size = 0x400, scoped, tag = 'output window, operand 0, single buffered']
    #allocation4 [shape = 's32[1]{0}', space=sflag, size = 0x4, scoped, tag = 'scoped memory for tpu_custom_call.1']
    %8 = vsyncpa [#allocation4], 0
    // Predicated region
    $region2: #{tpu_custom_call.1} parent=1 // pred_check
      _
    $region3: #{tpu_custom_call.1} parent=1 // pred_check_branch
      %10 = sbr.rel (0) target = $region5
    $region4: #{tpu_custom_call.1} parent=1 // pred_region
      _
    $region5: #{tpu_custom_call.1} parent=1 // pred_fallthru
      _
    // Predicated region
    $region6: #{tpu_custom_call.1} parent=1 // pred_check
      _
    $region7: #{tpu_custom_call.1} parent=1 // pred_check_branch
      %12 = sbr.rel (0) target = $region9
    $region8: #{tpu_custom_call.1} parent=1 // pred_region
      _
    $region9: #{tpu_custom_call.1} parent=1 // pred_fallthru
      _
    // Predicated region
    $region10: #{tpu_custom_call.1} parent=1 // pred_check
      _
    $region11: #{tpu_custom_call.1} parent=1 // pred_check_branch
      %14 = sbr.rel (0) target = $region13
    $region12: #{tpu_custom_call.1} parent=1 // pred_region
      _
    $region13: #{tpu_custom_call.1} parent=1 // pred_fallthru
      _
    %p15 = scmp.eq.s32.totalorder 0, 0
    // Predicated region
    $region14: #{tpu_custom_call.1} parent=1 // pred_check
      %p16 = pneg %p15
    $region15: #{tpu_custom_call.1} parent=1 // pred_check_branch
      %18 = sbr.rel (%p16) target = $region17
    $region16: #{tpu_custom_call.1} parent=1 // pred_region
      %vm19 = vcmask 7168
      %20 = vst.msk [vmem:[#allocation2] sm:$0xff] %vm19, 0.0
    $region17: #{tpu_custom_call.1} parent=1 // pred_fallthru
      _
    %v21 = vld [vmem:[%s0] sm:$0xf]
    %v22 = vunpack.c.l.bf16 %v21
    %v23 = vld [vmem:[%s1] sm:$0xff]
    %v24 = vld [vmem:[%s2] sm:$0xff]
    %v25 = vlaneseq
    %v26 = vand.u32 %v25, 127
    %27 = vset.pattern.permute.xlu0 0
    %28 = vperm.xlu0 %27, %v23
    %v29 = vpop.permute.xlu0 %28
    %vm30 = vcmp.eq.s32.totalorder %v26, %v29
    %32 = vset.pattern.permute.xlu0 0
    %33 = vperm.xlu0 %32, %v24
    %v34 = vpop.permute.xlu0 %33
    %v36 = vsub.f32 %v22, %v34
    %v37 = vsel %vm30, %v36, %v22
    %v38 = vmul.f32 %v37, 30.0
    %vm39 = vcmask 130048
    %v40 = vsel %vm39, %v38, -inf
    %41 = vmax.xlane.f32.xlu0 %v40
    %v42 = vpop.xlane.xlu0 %41
    %v43 = vsub.f32 %v38, %v42
    %v44 = vmul.f32 %v43, 1.442695
    %v45 = vpow.pop %v44
    %v46 = vsel %vm39, %v45, 0.0
    %47 = vadd.xlane.f32.xlu0 %v46
    %v48 = vpop.xlane.xlu0 %47
    %v49 = vlog2.pop %v48
    %v50 = vmul.f32 %v49, 0.6931472
    %v51 = vadd.f32 %v50, %v42
    %v52 = vsel %vm30, %v22, 0.0
    %v53 = vsel %vm39, %v52, 0.0
    %54 = vadd.xlane.f32.xlu0 %v53
    %v55 = vpop.xlane.xlu0 %54
    %v56 = vsub.f32 %v55, %v24
    %v57 = vmul.f32 %v56, 30.0
    %v58 = vsub.f32 %v51, %v57
    %s59 = smul.u32 0, 8
    %v60 = vlaneseq
    %v61 = vshrl.u32 %v60, 7
    %v62 = vstv %s59
    %v63 = vadd.s32 %v62, %v61
    %v64 = vld [vmem:[#allocation2] sm:$0xff]
    %vm65 = vcmp.lt.s32.totalorder %v63, 8
    %v66 = vsel %vm65, %v58, 0.0
    %v67 = vadd.f32 %v64, %v66
    %vm68 = vcmask 7168
    %69 = vst.msk [vmem:[#allocation2] sm:$0xff] %vm68, %v67
    // Predicated region
    $region18: #{tpu_custom_call.1} parent=1 // pred_check
      %p70 = pneg %p15
    $region19: #{tpu_custom_call.1} parent=1 // pred_check_branch
      %72 = sbr.rel (%p70) target = $region21
    $region20: #{tpu_custom_call.1} parent=1 // pred_region
      %v73 = vld [vmem:[#allocation2] sm:$0xff]
      %v74 = vsel %vm68, %v73, 0.0
      %75 = vadd.xlane.f32.xlu0 %v74
      %v76 = vpop.xlane.xlu0 %75
      %v77 = vrot.slane %v76, 4
      %v78 = vadd.f32 %v76, %v77
      %v79 = vrot.slane %v78, 2
      %v80 = vadd.f32 %v78, %v79
      %v81 = vrot.slane %v80, 1
      %v82 = vadd.f32 %v80, %v81
      %s83 = vtos %v82
      %v84 = vstv %s83
      %v85 = vmul.f32 %v84, 0.125
      %vm86 = vcmask 0
      %87 = vst.msk [vmem:[#allocation3] sm:$0x1] %vm86, %v85
    $region21: #{tpu_custom_call.1} parent=1 // pred_fallthru
      _
    // Predicated region
    $region22: #{tpu_custom_call.1} parent=1 // pred_check
      _
    $region23: #{tpu_custom_call.1} parent=1 // pred_check_branch
      %89 = sbr.rel (0) target = $region25
    $region24: #{tpu_custom_call.1} parent=1 // pred_region
      %s91 = ssub.s32 16, 16
      %92 = vsyncadd [#allocation4], %s91
      %s94 = sshll.u32 [#allocation3], 4
      %s95 = int_to_ptr.vmem [resolvable:$true] %s94
      %97 = dma.vmem_to_hbm [thread:$0]  %s95, 16, %s3, [#allocation4]
    $region25: #{tpu_custom_call.1} parent=1 // pred_fallthru
      _
    // Predicated region
    $region26: #{tpu_custom_call.1} parent=1 // pred_check
      _
    $region27: #{tpu_custom_call.1} parent=1 // pred_check_branch
      %99 = sbr.rel (0) target = $region29
    $region28: #{tpu_custom_call.1} parent=1 // pred_region
      %100 = dma.done [#allocation4], 16
    $region29: #{tpu_custom_call.1} parent=1 // pred_fallthru
      _
    %101 = vsyncpa [#allocation4], 1

</llo_original>
